<compile_context>
chip_gen: v7x
topology: tpu7x:2x2x1
jax: 0.10.0
libtpu: 0.0.40
codegen_flags: <defaults>
</compile_context>

<pallas_src>
import jax
import jax.numpy as jnp
from jax.experimental import pallas as pl
from jax.experimental.pallas import tpu as pltpu

KS = 3      # kernel size
PAD = 1     # padding
BN_EPS = 1e-5


# ----------------------------- Pallas kernel --------------------------------

def _unet_conv_kernel(x_ref, w1_ref, s1_ref, t1_ref, w2_ref, s2_ref, t2_ref,
                      o_ref, y1_ref):
    # x_ref : (1, Hp, W*Cin)     H-padded rows, channel-minor on lanes
    # w1_ref: (KS, W*Cin, W*C1)  banded layer-1 weights (dx shifts folded in)
    # s1,t1 : (1, W*C1)          folded BN scale / shift, tiled across W
    # w2_ref: (KS, W*C1, W*C2)   banded layer-2 weights
    # s2,t2 : (1, W*C2)
    # o_ref : (1, H, W*C2)       lane-dense output block
    # y1_ref: VMEM scratch (Hp, W*C1): layer-1 activations + zero halo rows
    hp = x_ref.shape[1]
    h = hp - 2 * PAD
    wc1 = w1_ref.shape[2]

    # ---- layer 1: Conv3x3 as KS row-shifted matmuls, fused BN(eval) + ReLU ----
    acc = jnp.dot(x_ref[0, 0:h, :], w1_ref[0],
                  preferred_element_type=jnp.float32)
    for dy in range(1, KS):
        acc += jnp.dot(x_ref[0, dy:dy + h, :], w1_ref[dy],
                       preferred_element_type=jnp.float32)
    y1 = jnp.maximum(acc * s1_ref[...] + t1_ref[...], 0.0)       # (H, W*C1)

    # Layer-1 activations stay resident in VMEM (zero top/bottom halo rows).
    halo = jnp.zeros((PAD, wc1), jnp.float32)
    y1_ref[0:PAD, :] = halo
    y1_ref[PAD + h:, :] = halo
    y1_ref[PAD:PAD + h, :] = y1

    # ---- layer 2: same structure, reading the VMEM-resident intermediate ----
    acc2 = jnp.dot(y1_ref[0:h, :], w2_ref[0],
                   preferred_element_type=jnp.float32)
    for dy in range(1, KS):
        acc2 += jnp.dot(y1_ref[dy:dy + h, :], w2_ref[dy],
                        preferred_element_type=jnp.float32)
    y2 = jnp.maximum(acc2 * s2_ref[...] + t2_ref[...], 0.0)      # (H, W*C2)
    o_ref[0] = y2.astype(o_ref.dtype)


# --------------------------- parameter folding -------------------------------

def fold_layer(w, b, gamma, beta, mean, var, width):
    """Fold Conv2d + eval-mode BN into banded matmul weights + scale/shift.

    w: (Cout, Cin, 3, 3) PyTorch conv weight.  Returns:
      w_band            : (KS, width*Cin, width*Cout)  per-dy banded weights
      scale_t, shift_t  : (1, width*Cout)              BN scale/shift tiled over W
    """
    cout, cin = w.shape[0], w.shape[1]
    wt = jnp.transpose(w, (2, 3, 1, 0))                 # (kh, kw, Cin, Cout)
    bands = []
    for dy in range(KS):
        m = jnp.zeros((width * cin, width * cout), w.dtype)
        for dx in range(KS):
            # shift[w_in, w_out] = 1 iff w_in == w_out + dx - PAD
            # (out-of-range taps simply have no entries -> implicit zero pad in W)
            shift_mat = jnp.eye(width, k=PAD - dx, dtype=w.dtype)
            m = m + jnp.kron(shift_mat, wt[dy, dx])
        bands.append(m)
    w_band = jnp.stack(bands, axis=0)                   # (KS, W*Cin, W*Cout)

    scale = gamma / jnp.sqrt(var + BN_EPS)              # (Cout,)
    shift = (b - mean) * scale + beta                   # (Cout,)
    scale_t = jnp.tile(scale, width).reshape(1, width * cout)
    shift_t = jnp.tile(shift, width).reshape(1, width * cout)
    return w_band, scale_t, shift_t


# ------------------------------- wrapper --------------------------------------

@jax.jit
def unet_conv_forward(x_nchw, params1, params2):
    """UnetConv forward (is_batchnorm=True, eval-mode BN). NCHW in / NCHW out."""
    n, cin, h, wd = x_nchw.shape
    c1 = params1[0].shape[0]
    c2 = params2[0].shape[0]
    hp = h + 2 * PAD

    w1, s1, t1 = fold_layer(*params1, width=wd)
    w2, s2, t2 = fold_layer(*params2, width=wd)

    # NCHW -> (N, Hp, W*Cin): channel-minor rows, zero halo rows top/bottom.
    # (Dropout(p=0) is the identity and is omitted.)
    x_rows = jnp.transpose(x_nchw, (0, 2, 3, 1))                  # NHWC
    x_rows = jnp.pad(x_rows, ((0, 0), (PAD, PAD), (0, 0), (0, 0)))
    x_rows = x_rows.reshape(n, hp, wd * cin)

    out = pl.pallas_call(
        _unet_conv_kernel,
        out_shape=jax.ShapeDtypeStruct((n, h, wd * c2), jnp.float32),
        grid=(n,),
        in_specs=[
            pl.BlockSpec((1, hp, wd * cin), lambda b: (b, 0, 0)),
            pl.BlockSpec((KS, wd * cin, wd * c1), lambda b: (0, 0, 0)),
            pl.BlockSpec((1, wd * c1), lambda b: (0, 0)),
            pl.BlockSpec((1, wd * c1), lambda b: (0, 0)),
            pl.BlockSpec((KS, wd * c1, wd * c2), lambda b: (0, 0, 0)),
            pl.BlockSpec((1, wd * c2), lambda b: (0, 0)),
            pl.BlockSpec((1, wd * c2), lambda b: (0, 0)),
        ],
        out_specs=pl.BlockSpec((1, h, wd * c2), lambda b: (b, 0, 0)),
        scratch_shapes=[pltpu.VMEM((hp, wd * c1), jnp.float32)],
        compiler_params=pltpu.CompilerParams(
            dimension_semantics=("parallel",)),
    )(x_rows, w1, s1, t1, w2, s2, t2)

    # (N, H, W*C2) is flattened NHWC -> back to NCHW (PyTorch contract).
    return jnp.transpose(out.reshape(n, h, wd, c2), (0, 3, 1, 2))


# --------------------------- parameter helpers --------------------------------

def init_layer_params(key, cin, cout):
    """Deterministic Conv2d + BatchNorm2d params (PyTorch shape conventions)."""
    kw, kb, kg, kbt, km, kv = jax.random.split(key, 6)
    fan_in = cin * KS * KS
    bound = 1.0 / jnp.sqrt(fan_in)
    w = jax.random.uniform(kw, (cout, cin, KS, KS), jnp.float32, -bound, bound)
    b = jax.random.uniform(kb, (cout,), jnp.float32, -bound, bound)
    gamma = 1.0 + 0.1 * jax.random.normal(kg, (cout,), jnp.float32)
    beta = 0.1 * jax.random.normal(kbt, (cout,), jnp.float32)
    running_mean = 0.1 * jax.random.normal(km, (cout,), jnp.float32)
    running_var = 1.0 + 0.1 * jax.random.uniform(kv, (cout,), jnp.float32)
    return w, b, gamma, beta, running_mean, running_var


# ------------------------------ reference -------------------------------------

def reference_forward(x_nchw, params1, params2):
    x = jnp.transpose(x_nchw, (0, 2, 3, 1))
    for (w, b, g, bt, m, v) in (params1, params2):
        w_hwio = jnp.transpose(w, (2, 3, 1, 0))  # HWIO
        y = jax.lax.conv_general_dilated(
            x, w_hwio, window_strides=(1, 1), padding=((PAD, PAD), (PAD, PAD)),
            dimension_numbers=("NHWC", "HWIO", "NHWC"))
        y = y + b
        y = (y - m) / jnp.sqrt(v + BN_EPS) * g + bt
        x = jnp.maximum(y, 0.0)
    return jnp.transpose(x, (0, 3, 1, 2))


# -------------------------------- main -----------------------------------------

if __name__ == "__main__":
    key = jax.random.PRNGKey(0)
    kx, k1, k2 = jax.random.split(key, 3)

    in_size, out_size = 4, 8
    N, H, W = 2, 16, 16

    x = jax.random.normal(kx, (N, in_size, H, W), jnp.float32)  # NCHW
    params1 = init_layer_params(k1, in_size, out_size)
    params2 = init_layer_params(k2, out_size, out_size)

    out = jax.block_until_ready(unet_conv_forward(x, params1, params2))
    ref = jax.block_until_ready(reference_forward(x, params1, params2))

    assert out.shape == (N, out_size, H, W)
    err = float(jnp.max(jnp.abs(out - ref)))
    assert err < 1e-4, f"max abs err = {err}"

    print("KERNEL_OK")
</pallas_src>

<mosaic_0001>
module attributes {stable_mosaic.version = 11 : i64} {
  func.func @_unet_conv_kernel(%arg0: i32, %arg1: memref<1x18x64xf32, #tpu.memory_space<vmem>>, %arg2: memref<3x64x128xf32, #tpu.memory_space<vmem>>, %arg3: memref<1x128xf32, #tpu.memory_space<vmem>>, %arg4: memref<1x128xf32, #tpu.memory_space<vmem>>, %arg5: memref<3x128x128xf32, #tpu.memory_space<vmem>>, %arg6: memref<1x128xf32, #tpu.memory_space<vmem>>, %arg7: memref<1x128xf32, #tpu.memory_space<vmem>>, %arg8: memref<1x16x128xf32, #tpu.memory_space<vmem>>, %arg9: memref<18x128xf32, #tpu.memory_space<vmem>>) attributes {dimension_semantics = [#tpu.dimension_semantics<parallel>], iteration_bounds = array<i64: 2>, scalar_prefetch = 0 : i64, scratch_operands = 1 : i64, tpu.core_type = #tpu.core_type<tc>, window_params = [{transform_indices = @transform_0, window_bounds = array<i64: 1, 18, 64>}, {pipeline_mode = #tpu.pipeline_mode<synchronous>, transform_indices = @transform_1, window_bounds = array<i64: 3, 64, 128>}, {pipeline_mode = #tpu.pipeline_mode<synchronous>, transform_indices = @transform_2, window_bounds = array<i64: 1, 128>}, {pipeline_mode = #tpu.pipeline_mode<synchronous>, transform_indices = @transform_3, window_bounds = array<i64: 1, 128>}, {pipeline_mode = #tpu.pipeline_mode<synchronous>, transform_indices = @transform_4, window_bounds = array<i64: 3, 128, 128>}, {pipeline_mode = #tpu.pipeline_mode<synchronous>, transform_indices = @transform_5, window_bounds = array<i64: 1, 128>}, {pipeline_mode = #tpu.pipeline_mode<synchronous>, transform_indices = @transform_6, window_bounds = array<i64: 1, 128>}, {transform_indices = @transform_7, window_bounds = array<i64: 1, 16, 128>}]} {
    %c0 = arith.constant 0 : index
    %c0_0 = arith.constant 0 : index
    %c0_1 = arith.constant 0 : index
    %0 = vector.load %arg1[%c0, %c0_0, %c0_1] : memref<1x18x64xf32, #tpu.memory_space<vmem>>, vector<1x16x64xf32>
    %1 = vector.shape_cast %0 : vector<1x16x64xf32> to vector<16x64xf32>
    %c0_2 = arith.constant 0 : index
    %c0_3 = arith.constant 0 : index
    %c0_4 = arith.constant 0 : index
    %2 = vector.load %arg2[%c0_2, %c0_3, %c0_4] : memref<3x64x128xf32, #tpu.memory_space<vmem>>, vector<1x64x128xf32>
    %3 = vector.shape_cast %2 : vector<1x64x128xf32> to vector<64x128xf32>
    %cst = arith.constant dense<0.000000e+00> : vector<16x128xf32>
    %4 = tpu.matmul %1, %3, %cst {dimension_numbers = #tpu.dot_dimension_numbers<[1], [0], [0], [1], [0, 0, 1, 1], [], []>} : vector<16x64xf32>, vector<64x128xf32>, vector<16x128xf32> -> vector<16x128xf32>
    %c0_5 = arith.constant 0 : index
    %c1 = arith.constant 1 : index
    %c0_6 = arith.constant 0 : index
    %5 = vector.load %arg1[%c0_5, %c1, %c0_6] : memref<1x18x64xf32, #tpu.memory_space<vmem>>, vector<1x16x64xf32>
    %6 = vector.shape_cast %5 : vector<1x16x64xf32> to vector<16x64xf32>
    %c1_7 = arith.constant 1 : index
    %c0_8 = arith.constant 0 : index
    %c0_9 = arith.constant 0 : index
    %7 = vector.load %arg2[%c1_7, %c0_8, %c0_9] : memref<3x64x128xf32, #tpu.memory_space<vmem>>, vector<1x64x128xf32>
    %8 = vector.shape_cast %7 : vector<1x64x128xf32> to vector<64x128xf32>
    %cst_10 = arith.constant dense<0.000000e+00> : vector<16x128xf32>
    %9 = tpu.matmul %6, %8, %cst_10 {dimension_numbers = #tpu.dot_dimension_numbers<[1], [0], [0], [1], [0, 0, 1, 1], [], []>} : vector<16x64xf32>, vector<64x128xf32>, vector<16x128xf32> -> vector<16x128xf32>
    %10 = arith.addf %4, %9 : vector<16x128xf32>
    %c0_11 = arith.constant 0 : index
    %c2 = arith.constant 2 : index
    %c0_12 = arith.constant 0 : index
    %11 = vector.load %arg1[%c0_11, %c2, %c0_12] : memref<1x18x64xf32, #tpu.memory_space<vmem>>, vector<1x16x64xf32>
    %12 = vector.shape_cast %11 : vector<1x16x64xf32> to vector<16x64xf32>
    %c2_13 = arith.constant 2 : index
    %c0_14 = arith.constant 0 : index
    %c0_15 = arith.constant 0 : index
    %13 = vector.load %arg2[%c2_13, %c0_14, %c0_15] : memref<3x64x128xf32, #tpu.memory_space<vmem>>, vector<1x64x128xf32>
    %14 = vector.shape_cast %13 : vector<1x64x128xf32> to vector<64x128xf32>
    %cst_16 = arith.constant dense<0.000000e+00> : vector<16x128xf32>
    %15 = tpu.matmul %12, %14, %cst_16 {dimension_numbers = #tpu.dot_dimension_numbers<[1], [0], [0], [1], [0, 0, 1, 1], [], []>} : vector<16x64xf32>, vector<64x128xf32>, vector<16x128xf32> -> vector<16x128xf32>
    %16 = arith.addf %10, %15 : vector<16x128xf32>
    %c0_17 = arith.constant 0 : index
    %c0_18 = arith.constant 0 : index
    %17 = vector.load %arg3[%c0_17, %c0_18] : memref<1x128xf32, #tpu.memory_space<vmem>>, vector<1x128xf32>
    %18 = vector.broadcast %17 : vector<1x128xf32> to vector<16x128xf32>
    %19 = arith.mulf %16, %18 : vector<16x128xf32>
    %c0_19 = arith.constant 0 : index
    %c0_20 = arith.constant 0 : index
    %20 = vector.load %arg4[%c0_19, %c0_20] : memref<1x128xf32, #tpu.memory_space<vmem>>, vector<1x128xf32>
    %21 = vector.broadcast %20 : vector<1x128xf32> to vector<16x128xf32>
    %22 = arith.addf %19, %21 : vector<16x128xf32>
    %cst_21 = arith.constant 0.000000e+00 : f32
    %23 = vector.broadcast %cst_21 : f32 to vector<16x128xf32>
    %24 = arith.maximumf %22, %23 : vector<16x128xf32>
    %cst_22 = arith.constant 0.000000e+00 : f32
    %25 = vector.broadcast %cst_22 : f32 to vector<1x128xf32>
    %c0_23 = arith.constant 0 : index
    %c0_24 = arith.constant 0 : index
    %26 = vector.load %arg9[%c0_23, %c0_24] : memref<18x128xf32, #tpu.memory_space<vmem>>, vector<1x128xf32>
    tpu.vector_store %arg9[%c0_23, %c0_24], %25 {strides = array<i32>} : memref<18x128xf32, #tpu.memory_space<vmem>>, vector<1x128xf32>,
    %c17 = arith.constant 17 : index
    %c0_25 = arith.constant 0 : index
    %27 = vector.load %arg9[%c17, %c0_25] : memref<18x128xf32, #tpu.memory_space<vmem>>, vector<1x128xf32>
    tpu.vector_store %arg9[%c17, %c0_25], %25 {strides = array<i32>} : memref<18x128xf32, #tpu.memory_space<vmem>>, vector<1x128xf32>,
    %c1_26 = arith.constant 1 : index
    %c0_27 = arith.constant 0 : index
    %28 = vector.load %arg9[%c1_26, %c0_27] : memref<18x128xf32, #tpu.memory_space<vmem>>, vector<16x128xf32>
    tpu.vector_store %arg9[%c1_26, %c0_27], %24 {strides = array<i32>} : memref<18x128xf32, #tpu.memory_space<vmem>>, vector<16x128xf32>,
    %c0_28 = arith.constant 0 : index
    %c0_29 = arith.constant 0 : index
    %29 = vector.load %arg9[%c0_28, %c0_29] : memref<18x128xf32, #tpu.memory_space<vmem>>, vector<16x128xf32>
    %c0_30 = arith.constant 0 : index
    %c0_31 = arith.constant 0 : index
    %c0_32 = arith.constant 0 : index
    %30 = vector.load %arg5[%c0_30, %c0_31, %c0_32] : memref<3x128x128xf32, #tpu.memory_space<vmem>>, vector<1x128x128xf32>
    %31 = vector.shape_cast %30 : vector<1x128x128xf32> to vector<128x128xf32>
    %cst_33 = arith.constant dense<0.000000e+00> : vector<16x128xf32>
    %32 = tpu.matmul %29, %31, %cst_33 {dimension_numbers = #tpu.dot_dimension_numbers<[1], [0], [0], [1], [0, 0, 1, 1], [], []>} : vector<16x128xf32>, vector<128x128xf32>, vector<16x128xf32> -> vector<16x128xf32>
    %c1_34 = arith.constant 1 : index
    %c0_35 = arith.constant 0 : index
    %33 = vector.load %arg9[%c1_34, %c0_35] : memref<18x128xf32, #tpu.memory_space<vmem>>, vector<16x128xf32>
    %c1_36 = arith.constant 1 : index
    %c0_37 = arith.constant 0 : index
    %c0_38 = arith.constant 0 : index
    %34 = vector.load %arg5[%c1_36, %c0_37, %c0_38] : memref<3x128x128xf32, #tpu.memory_space<vmem>>, vector<1x128x128xf32>
    %35 = vector.shape_cast %34 : vector<1x128x128xf32> to vector<128x128xf32>
    %cst_39 = arith.constant dense<0.000000e+00> : vector<16x128xf32>
    %36 = tpu.matmul %33, %35, %cst_39 {dimension_numbers = #tpu.dot_dimension_numbers<[1], [0], [0], [1], [0, 0, 1, 1], [], []>} : vector<16x128xf32>, vector<128x128xf32>, vector<16x128xf32> -> vector<16x128xf32>
    %37 = arith.addf %32, %36 : vector<16x128xf32>
    %c2_40 = arith.constant 2 : index
    %c0_41 = arith.constant 0 : index
    %38 = vector.load %arg9[%c2_40, %c0_41] : memref<18x128xf32, #tpu.memory_space<vmem>>, vector<16x128xf32>
    %c2_42 = arith.constant 2 : index
    %c0_43 = arith.constant 0 : index
    %c0_44 = arith.constant 0 : index
    %39 = vector.load %arg5[%c2_42, %c0_43, %c0_44] : memref<3x128x128xf32, #tpu.memory_space<vmem>>, vector<1x128x128xf32>
    %40 = vector.shape_cast %39 : vector<1x128x128xf32> to vector<128x128xf32>
    %cst_45 = arith.constant dense<0.000000e+00> : vector<16x128xf32>
    %41 = tpu.matmul %38, %40, %cst_45 {dimension_numbers = #tpu.dot_dimension_numbers<[1], [0], [0], [1], [0, 0, 1, 1], [], []>} : vector<16x128xf32>, vector<128x128xf32>, vector<16x128xf32> -> vector<16x128xf32>
    %42 = arith.addf %37, %41 : vector<16x128xf32>
    %c0_46 = arith.constant 0 : index
    %c0_47 = arith.constant 0 : index
    %43 = vector.load %arg6[%c0_46, %c0_47] : memref<1x128xf32, #tpu.memory_space<vmem>>, vector<1x128xf32>
    %44 = vector.broadcast %43 : vector<1x128xf32> to vector<16x128xf32>
    %45 = arith.mulf %42, %44 : vector<16x128xf32>
    %c0_48 = arith.constant 0 : index
    %c0_49 = arith.constant 0 : index
    %46 = vector.load %arg7[%c0_48, %c0_49] : memref<1x128xf32, #tpu.memory_space<vmem>>, vector<1x128xf32>
    %47 = vector.broadcast %46 : vector<1x128xf32> to vector<16x128xf32>
    %48 = arith.addf %45, %47 : vector<16x128xf32>
    %cst_50 = arith.constant 0.000000e+00 : f32
    %49 = vector.broadcast %cst_50 : f32 to vector<16x128xf32>
    %50 = arith.maximumf %48, %49 : vector<16x128xf32>
    %c0_51 = arith.constant 0 : index
    %c0_52 = arith.constant 0 : index
    %c0_53 = arith.constant 0 : index
    %51 = vector.load %arg8[%c0_51, %c0_52, %c0_53] : memref<1x16x128xf32, #tpu.memory_space<vmem>>, vector<1x16x128xf32>
    %52 = vector.shape_cast %51 : vector<1x16x128xf32> to vector<16x128xf32>
    %53 = vector.shape_cast %50 : vector<16x128xf32> to vector<1x16x128xf32>
    tpu.vector_store %arg8[%c0_51, %c0_52, %c0_53], %53 {strides = array<i32>} : memref<1x16x128xf32, #tpu.memory_space<vmem>>, vector<1x16x128xf32>,
    return
  }
  func.func @transform_0(%arg0: i32) -> (i32, i32, i32) {
    %c0_i32 = arith.constant 0 : i32
    %c0_i32_0 = arith.constant 0 : i32
    %c0_i32_1 = arith.constant 0 : i32
    return %arg0, %c0_i32, %c0_i32_0 : i32, i32, i32
  }
  func.func @transform_1(%arg0: i32) -> (i32, i32, i32) {
    %c0_i32 = arith.constant 0 : i32
    %c0_i32_0 = arith.constant 0 : i32
    %c0_i32_1 = arith.constant 0 : i32
    %c0_i32_2 = arith.constant 0 : i32
    return %c0_i32, %c0_i32_0, %c0_i32_1 : i32, i32, i32
  }
  func.func @transform_2(%arg0: i32) -> (i32, i32) {
    %c0_i32 = arith.constant 0 : i32
    %c0_i32_0 = arith.constant 0 : i32
    %c0_i32_1 = arith.constant 0 : i32
    return %c0_i32, %c0_i32_0 : i32, i32
  }
  func.func @transform_3(%arg0: i32) -> (i32, i32) {
    %c0_i32 = arith.constant 0 : i32
    %c0_i32_0 = arith.constant 0 : i32
    %c0_i32_1 = arith.constant 0 : i32
    return %c0_i32, %c0_i32_0 : i32, i32
  }
  func.func @transform_4(%arg0: i32) -> (i32, i32, i32) {
    %c0_i32 = arith.constant 0 : i32
    %c0_i32_0 = arith.constant 0 : i32
    %c0_i32_1 = arith.constant 0 : i32
    %c0_i32_2 = arith.constant 0 : i32
    return %c0_i32, %c0_i32_0, %c0_i32_1 : i32, i32, i32
  }
  func.func @transform_5(%arg0: i32) -> (i32, i32) {
    %c0_i32 = arith.constant 0 : i32
    %c0_i32_0 = arith.constant 0 : i32
    %c0_i32_1 = arith.constant 0 : i32
    return %c0_i32, %c0_i32_0 : i32, i32
  }
  func.func @transform_6(%arg0: i32) -> (i32, i32) {
    %c0_i32 = arith.constant 0 : i32
    %c0_i32_0 = arith.constant 0 : i32
    %c0_i32_1 = arith.constant 0 : i32
    return %c0_i32, %c0_i32_0 : i32, i32
  }
  func.func @transform_7(%arg0: i32) -> (i32, i32, i32) {
    %c0_i32 = arith.constant 0 : i32
    %c0_i32_0 = arith.constant 0 : i32
    %c0_i32_1 = arith.constant 0 : i32
    return %arg0, %c0_i32, %c0_i32_0 : i32, i32, i32
  }
}

</mosaic_0001>

<llo_original>
// kernel: tile.23
$region0: #{tile.23}
  #allocation0 [shape = 's32[1]{0}', space=sflag, size = 0x4, scoped, tag = 'scoped memory for tile.23']
  %s0 = inlined_call_operand.vmem [shape: f32[8], index: 0, kind: input, shape index: {}]
  %s1 = inlined_call_operand.vmem [shape: f32[16,8], index: 1, kind: output, shape index: {}]
  // Predicated region
  $region2: #{tile.23} parent=0 // pred_check
    _
  $region3: #{tile.23} parent=0 // pred_check_branch
    %3 = sbr.rel (0) target = $region5
  $region4: #{tile.23} parent=0 // pred_region
    _
  $region5: #{tile.23} parent=0 // pred_fallthru
    _
  %v4 = vld [vmem:[%s0] ss:$0 sm:$0xff]
  %5 = vst [vmem:[%s1] sm:$0xff] %v4
  %s6 = scalar_lea.vmem %s1, 8
  %7 = vst [vmem:[%s6] sm:$0xff] %v4

// kernel: tile.24
$region0: #{tile.24}
  %s0 = inlined_call_operand.vmem [shape: f32[16,8], index: 0, kind: input, shape index: {}]
  %s1 = inlined_call_operand.vmem [shape: f32[1,128], index: 1, kind: output, shape index: {}]
  $region1: #{tile.24} parent=0
    #allocation0 [shape = 'u8[4096]{0}', space=vmem, size = 0x1000, scoped, tag = 'scoped mem for output reshape']
    %v2 = vld [vmem:[%s0] sm:$0x1]
    %vm3 = vcmask 64512
    %4 = vst.msk [vmem:[#allocation0] sm:$0x1] %vm3, %v2
    %s5 = scalar_lea.vmem %s0, 15
    %v6 = vld [vmem:[%s5] sm:$0x1]
    %7 = vrot.lane.b32.xlu0 %v6, 120
    %v8 = vpop.permute.xlu0 %7
    %vm9 = vcmask 1048512
    %10 = vst.msk [vmem:[#allocation0] sm:$0x1] %vm9, %v8
    %s11 = scalar_lea.vmem %s0, 14
    %v12 = vld [vmem:[%s11] sm:$0x1]
    %13 = vrot.lane.b32.xlu0 %v12, 112
    %v14 = vpop.permute.xlu0 %13
    %vm15 = vcmask 982912
    %16 = vst.msk [vmem:[#allocation0] sm:$0x1] %vm15, %v14
    %s17 = scalar_lea.vmem %s0, 13
    %v18 = vld [vmem:[%s17] sm:$0x1]
    %19 = vrot.lane.b32.xlu0 %v18, 104
    %v20 = vpop.permute.xlu0 %19
    %vm21 = vcmask 917312
    %22 = vst.msk [vmem:[#allocation0] sm:$0x1] %vm21, %v20
    %s23 = scalar_lea.vmem %s0, 12
    %v24 = vld [vmem:[%s23] sm:$0x1]
    %25 = vrot.lane.b32.xlu0 %v24, 96
    %v26 = vpop.permute.xlu0 %25
    %vm27 = vcmask 851712
    %28 = vst.msk [vmem:[#allocation0] sm:$0x1] %vm27, %v26
    %s29 = scalar_lea.vmem %s0, 11
    %v30 = vld [vmem:[%s29] sm:$0x1]
    %31 = vrot.lane.b32.xlu0 %v30, 88
    %v32 = vpop.permute.xlu0 %31
    %vm33 = vcmask 786112
    %34 = vst.msk [vmem:[#allocation0] sm:$0x1] %vm33, %v32
    %s35 = scalar_lea.vmem %s0, 10
    %v36 = vld [vmem:[%s35] sm:$0x1]
    %37 = vrot.lane.b32.xlu0 %v36, 80
    %v38 = vpop.permute.xlu0 %37
    %vm39 = vcmask 720512
    %40 = vst.msk [vmem:[#allocation0] sm:$0x1] %vm39, %v38
    %s41 = scalar_lea.vmem %s0, 9
    %v42 = vld [vmem:[%s41] sm:$0x1]
    %43 = vrot.lane.b32.xlu0 %v42, 72
    %v44 = vpop.permute.xlu0 %43
    %vm45 = vcmask 654912
    %46 = vst.msk [vmem:[#allocation0] sm:$0x1] %vm45, %v44
    %s47 = scalar_lea.vmem %s0, 8
    %v48 = vld [vmem:[%s47] sm:$0x1]
    %49 = vrot.lane.b32.xlu0 %v48, 64
    %v50 = vpop.permute.xlu0 %49
    %vm51 = vcmask 589312
    %52 = vst.msk [vmem:[#allocation0] sm:$0x1] %vm51, %v50
    %s53 = scalar_lea.vmem %s0, 7
    %v54 = vld [vmem:[%s53] sm:$0x1]
    %55 = vrot.lane.b32.xlu0 %v54, 56
    %v56 = vpop.permute.xlu0 %55
    %vm57 = vcmask 523712
    %58 = vst.msk [vmem:[#allocation0] sm:$0x1] %vm57, %v56
    %s59 = scalar_lea.vmem %s0, 6
    %v60 = vld [vmem:[%s59] sm:$0x1]
    %61 = vrot.lane.b32.xlu0 %v60, 48
    %v62 = vpop.permute.xlu0 %61
    %vm63 = vcmask 458112
    %64 = vst.msk [vmem:[#allocation0] sm:$0x1] %vm63, %v62
    %s65 = scalar_lea.vmem %s0, 5
    %v66 = vld [vmem:[%s65] sm:$0x1]
    %67 = vrot.lane.b32.xlu0 %v66, 40
    %v68 = vpop.permute.xlu0 %67
    %vm69 = vcmask 392512
    %70 = vst.msk [vmem:[#allocation0] sm:$0x1] %vm69, %v68
    %s71 = scalar_lea.vmem %s0, 4
    %v72 = vld [vmem:[%s71] sm:$0x1]
    %73 = vrot.lane.b32.xlu0 %v72, 32
    %v74 = vpop.permute.xlu0 %73
    %vm75 = vcmask 326912
    %76 = vst.msk [vmem:[#allocation0] sm:$0x1] %vm75, %v74
    %s77 = scalar_lea.vmem %s0, 3
    %v78 = vld [vmem:[%s77] sm:$0x1]
    %79 = vrot.lane.b32.xlu0 %v78, 24
    %v80 = vpop.permute.xlu0 %79
    %vm81 = vcmask 261312
    %82 = vst.msk [vmem:[#allocation0] sm:$0x1] %vm81, %v80
    %s83 = scalar_lea.vmem %s0, 2
    %v84 = vld [vmem:[%s83] sm:$0x1]
    %85 = vrot.lane.b32.xlu0 %v84, 16
    %v86 = vpop.permute.xlu0 %85
    %vm87 = vcmask 195712
    %88 = vst.msk [vmem:[#allocation0] sm:$0x1] %vm87, %v86
    %s89 = scalar_lea.vmem %s0, 1
    %v90 = vld [vmem:[%s89] sm:$0x1]
    %91 = vrot.lane.b32.xlu0 %v90, 8
    %v92 = vpop.permute.xlu0 %91
    %vm93 = vcmask 130112
    %94 = vst.msk [vmem:[#allocation0] sm:$0x1] %vm93, %v92
    %s96 = sshllo.u32 0, 1
    %v98 = vld [vmem:[#allocation0] sm:%s96]
    %s99 = sshllo.u32 0, 1
    %100 = vst [vmem:[%s1] sm:%s99] %v98

// kernel: unet_conv_forward.1
$region0: #{unet_conv_forward.1}
  #allocation0 [shape = 'u32[]', space=smem, size = 0x4, offset = 0x4, fixed_abs, tag = 'smem constant byte address 0x4 - core index']
  #allocation1 [shape = 'u32[144,128]{1,0:T(1,128)}', space=vmem, size = 0x12000, scoped, tag = 'internal scratch']
  #allocation2 [shape = 'f32[18,128]{1,0:T(8,128)}', space=vmem, size = 0x3000, scoped, tag = 'scratch operand']
  %s0 = inlined_call_operand.vmem [shape: f32[2,18,64], index: 0, kind: input, shape index: {}]
  %s1 = inlined_call_operand.vmem [shape: f32[3,64,128], index: 1, kind: input, shape index: {}]
  %s2 = inlined_call_operand.vmem [shape: f32[1,128], index: 2, kind: input, shape index: {}]
  %s3 = inlined_call_operand.vmem [shape: f32[1,128], index: 3, kind: input, shape index: {}]
  %s4 = inlined_call_operand.vmem [shape: f32[3,128,128], index: 4, kind: input, shape index: {}]
  %s5 = inlined_call_operand.vmem [shape: f32[1,128], index: 5, kind: input, shape index: {}]
  %s6 = inlined_call_operand.vmem [shape: f32[1,128], index: 6, kind: input, shape index: {}]
  %s7 = inlined_call_operand.vmem [shape: f32[2,16,128], index: 7, kind: output, shape index: {}]
  %s8 = sld [smem:[#allocation0]]
  $region61: #{unet_conv_forward.1} parent=0
    _
  %s10 = ssub.s32 1, %s8
  %s11 = scalar_select 0, %s10, %s8
  loop: start=0, step=1, limit=4
  $region2: #{unet_conv_forward.1} parent=0 // loop_pre_header
    _
  $region3: #{unet_conv_forward.1} parent=0 // loop_header
    %s13 = sphi 0, %s17
    %p14 = scmp.ge.s32.totalorder %s13, 4
    %s23 = sphi 0, %s25
    %s26 = sphi 0, %s23
    %s27 = sphi 0, %s26
    %s43 = sphi 0, %s27
    %s47 = sphi 0, %s47
    %s49 = sphi 0, %s47
    %s50 = sphi 0, %s49
    %s64 = sphi 0, %s50
    %s68 = sphi 0, %s68
    %s70 = sphi 0, %s68
    %s71 = sphi 0, %s70
    %s85 = sphi 0, %s71
    %s89 = sphi 0, %s89
    %s91 = sphi 0, %s89
    %s92 = sphi 0, %s91
    %s106 = sphi 0, %s92
    %s110 = sphi 0, %s110
    %s112 = sphi 0, %s110
    %s113 = sphi 0, %s112
    %s127 = sphi 0, %s113
    %s131 = sphi 0, %s131
    %s133 = sphi 0, %s131
    %s134 = sphi 0, %s133
    %s148 = sphi 0, %s134
    %s152 = sphi 0, %s152
    %s154 = sphi 0, %s152
    %s155 = sphi 0, %s154
    %s169 = sphi 0, %s155
    %s175 = sphi 0, %s177
    %s178 = sphi 0, %s175
    %s179 = sphi 0, %s178
    %s195 = sphi 0, %s179
  $region4: #{unet_conv_forward.1} parent=0 // loop_header_branch
    %16 = sbr.rel (%p14) target = $region8
  $region5: #{unet_conv_forward.1} parent=0 // loop_body
    %s18 = ssub.s32 %s13, 1
    %s19 = ssub.s32 %s13, 2
    %s20 = sadd.s32 %s13, 1
    %s21 = ssub.s32 %s13, %s20
    %p22 = scmp.eq.s32.totalorder %s21, 0
    %s24 = sadd.s32 %s23, 1
    %s25 = scalar_select %p22, %s23, %s24
    %p28 = pneg %p22
    %p29 = scmp.eq.s32.totalorder %s13, 1
    %p30 = por %p28, %p29
    %p31 = scmp.ne.s32.totalorder %s23, %s26
    %p32 = scmp.eq.s32.totalorder %s13, 0
    %p33 = por %p31, %p32
    %p34 = scmp.ne.s32.totalorder %s23, %s26
    %p35 = scmp.eq.s32.totalorder %s18, 1
    %p36 = por %p34, %p35
    %p37 = scmp.ne.s32.totalorder %s26, %s27
    %p38 = scmp.eq.s32.totalorder %s18, 0
    %p39 = por %p37, %p38
    %p40 = scmp.ne.s32.totalorder %s26, %s27
    %p41 = scmp.eq.s32.totalorder %s19, 1
    %p42 = por %p40, %p41
    %p44 = scmp.ne.s32.totalorder %s27, %s43
    %p45 = scmp.eq.s32.totalorder %s19, 0
    %p46 = por %p44, %p45
    %s48 = sadd.s32 %s47, 1
    %p51 = scmp.eq.s32.totalorder %s13, 1
    %p52 = scmp.ne.s32.totalorder %s47, %s49
    %p53 = scmp.eq.s32.totalorder %s13, 0
    %p54 = por %p52, %p53
    %p55 = scmp.ne.s32.totalorder %s47, %s49
    %p56 = scmp.eq.s32.totalorder %s18, 1
    %p57 = por %p55, %p56
    %p58 = scmp.ne.s32.totalorder %s49, %s50
    %p59 = scmp.eq.s32.totalorder %s18, 0
    %p60 = por %p58, %p59
    %p61 = scmp.ne.s32.totalorder %s49, %s50
    %p62 = scmp.eq.s32.totalorder %s19, 1
    %p63 = por %p61, %p62
    %p65 = scmp.ne.s32.totalorder %s50, %s64
    %p66 = scmp.eq.s32.totalorder %s19, 0
    %p67 = por %p65, %p66
    %s69 = sadd.s32 %s68, 1
    %p72 = scmp.eq.s32.totalorder %s13, 1
    %p73 = scmp.ne.s32.totalorder %s68, %s70
    %p74 = scmp.eq.s32.totalorder %s13, 0
    %p75 = por %p73, %p74
    %p76 = scmp.ne.s32.totalorder %s68, %s70
    %p77 = scmp.eq.s32.totalorder %s18, 1
    %p78 = por %p76, %p77
    %p79 = scmp.ne.s32.totalorder %s70, %s71
    %p80 = scmp.eq.s32.totalorder %s18, 0
    %p81 = por %p79, %p80
    %p82 = scmp.ne.s32.totalorder %s70, %s71
    %p83 = scmp.eq.s32.totalorder %s19, 1
    %p84 = por %p82, %p83
    %p86 = scmp.ne.s32.totalorder %s71, %s85
    %p87 = scmp.eq.s32.totalorder %s19, 0
    %p88 = por %p86, %p87
    %s90 = sadd.s32 %s89, 1
    %p93 = scmp.eq.s32.totalorder %s13, 1
    %p94 = scmp.ne.s32.totalorder %s89, %s91
    %p95 = scmp.eq.s32.totalorder %s13, 0
    %p96 = por %p94, %p95
    %p97 = scmp.ne.s32.totalorder %s89, %s91
    %p98 = scmp.eq.s32.totalorder %s18, 1
    %p99 = por %p97, %p98
    %p100 = scmp.ne.s32.totalorder %s91, %s92
    %p101 = scmp.eq.s32.totalorder %s18, 0
    %p102 = por %p100, %p101
    %p103 = scmp.ne.s32.totalorder %s91, %s92
    %p104 = scmp.eq.s32.totalorder %s19, 1
    %p105 = por %p103, %p104
    %p107 = scmp.ne.s32.totalorder %s92, %s106
    %p108 = scmp.eq.s32.totalorder %s19, 0
    %p109 = por %p107, %p108
    %s111 = sadd.s32 %s110, 1
    %p114 = scmp.eq.s32.totalorder %s13, 1
    %p115 = scmp.ne.s32.totalorder %s110, %s112
    %p116 = scmp.eq.s32.totalorder %s13, 0
    %p117 = por %p115, %p116
    %p118 = scmp.ne.s32.totalorder %s110, %s112
    %p119 = scmp.eq.s32.totalorder %s18, 1
    %p120 = por %p118, %p119
    %p121 = scmp.ne.s32.totalorder %s112, %s113
    %p122 = scmp.eq.s32.totalorder %s18, 0
    %p123 = por %p121, %p122
    %p124 = scmp.ne.s32.totalorder %s112, %s113
    %p125 = scmp.eq.s32.totalorder %s19, 1
    %p126 = por %p124, %p125
    %p128 = scmp.ne.s32.totalorder %s113, %s127
    %p129 = scmp.eq.s32.totalorder %s19, 0
    %p130 = por %p128, %p129
    %s132 = sadd.s32 %s131, 1
    %p135 = scmp.eq.s32.totalorder %s13, 1
    %p136 = scmp.ne.s32.totalorder %s131, %s133
    %p137 = scmp.eq.s32.totalorder %s13, 0
    %p138 = por %p136, %p137
    %p139 = scmp.ne.s32.totalorder %s131, %s133
    %p140 = scmp.eq.s32.totalorder %s18, 1
    %p141 = por %p139, %p140
    %p142 = scmp.ne.s32.totalorder %s133, %s134
    %p143 = scmp.eq.s32.totalorder %s18, 0
    %p144 = por %p142, %p143
    %p145 = scmp.ne.s32.totalorder %s133, %s134
    %p146 = scmp.eq.s32.totalorder %s19, 1
    %p147 = por %p145, %p146
    %p149 = scmp.ne.s32.totalorder %s134, %s148
    %p150 = scmp.eq.s32.totalorder %s19, 0
    %p151 = por %p149, %p150
    %s153 = sadd.s32 %s152, 1
    %p156 = scmp.eq.s32.totalorder %s13, 1
    %p157 = scmp.ne.s32.totalorder %s152, %s154
    %p158 = scmp.eq.s32.totalorder %s13, 0
    %p159 = por %p157, %p158
    %p160 = scmp.ne.s32.totalorder %s152, %s154
    %p161 = scmp.eq.s32.totalorder %s18, 1
    %p162 = por %p160, %p161
    %p163 = scmp.ne.s32.totalorder %s154, %s155
    %p164 = scmp.eq.s32.totalorder %s18, 0
    %p165 = por %p163, %p164
    %p166 = scmp.ne.s32.totalorder %s154, %s155
    %p167 = scmp.eq.s32.totalorder %s19, 1
    %p168 = por %p166, %p167
    %p170 = scmp.ne.s32.totalorder %s155, %s169
    %p171 = scmp.eq.s32.totalorder %s19, 0
    %p172 = por %p170, %p171
    %s173 = ssub.s32 %s13, %s20
    %p174 = scmp.eq.s32.totalorder %s173, 0
    %s176 = sadd.s32 %s175, 1
    %s177 = scalar_select %p174, %s175, %s176
    %p180 = pneg %p174
    %p181 = scmp.eq.s32.totalorder %s13, 1
    %p182 = por %p180, %p181
    %p183 = scmp.ne.s32.totalorder %s175, %s178
    %p184 = scmp.eq.s32.totalorder %s13, 0
    %p185 = por %p183, %p184
    %p186 = scmp.ne.s32.totalorder %s175, %s178
    %p187 = scmp.eq.s32.totalorder %s18, 1
    %p188 = por %p186, %p187
    %p189 = scmp.ne.s32.totalorder %s178, %s179
    %p190 = scmp.eq.s32.totalorder %s18, 0
    %p191 = por %p189, %p190
    %p192 = scmp.ne.s32.totalorder %s178, %s179
    %p193 = scmp.eq.s32.totalorder %s19, 1
    %p194 = por %p192, %p193
    %p196 = scmp.ne.s32.totalorder %s179, %s195
    %p197 = scmp.eq.s32.totalorder %s19, 0
    %p198 = por %p196, %p197
    %p199 = scmp.le.s32.totalorder 1, %s13
    %p200 = scmp.lt.s32.totalorder %s13, 3
    %p201 = pnand %p199, %p200
    %p202 = pneg %p201
    // Predicated region
    $region9: #{unet_conv_forward.1} parent=5 // pred_check
      _
    $region10: #{unet_conv_forward.1} parent=5 // pred_check_branch
      %204 = sbr.rel (%p201) target = $region12
    $region11: #{unet_conv_forward.1} parent=5 // pred_region
      %s205 = ssub.s32 %s13, 1
      // Predicated region
      $region13: #{unet_conv_forward.1} parent=11 // pred_check
        %p206 = pneg %p60
      $region14: #{unet_conv_forward.1} parent=11 // pred_check_branch
        %208 = sbr.rel (%p206) target = $region16
      $region15: #{unet_conv_forward.1} parent=11 // pred_region
        _
      $region16: #{unet_conv_forward.1} parent=11 // pred_fallthru
        _
      // Predicated region
      $region17: #{unet_conv_forward.1} parent=11 // pred_check
        %p209 = pneg %p81
      $region18: #{unet_conv_forward.1} parent=11 // pred_check_branch
        %211 = sbr.rel (%p209) target = $region20
      $region19: #{unet_conv_forward.1} parent=11 // pred_region
        _
      $region20: #{unet_conv_forward.1} parent=11 // pred_fallthru
        _
      // Predicated region
      $region21: #{unet_conv_forward.1} parent=11 // pred_check
        %p212 = pneg %p102
      $region22: #{unet_conv_forward.1} parent=11 // pred_check_branch
        %214 = sbr.rel (%p212) target = $region24
      $region23: #{unet_conv_forward.1} parent=11 // pred_region
        _
      $region24: #{unet_conv_forward.1} parent=11 // pred_fallthru
        _
      // Predicated region
      $region25: #{unet_conv_forward.1} parent=11 // pred_check
        %p215 = pneg %p123
      $region26: #{unet_conv_forward.1} parent=11 // pred_check_branch
        %217 = sbr.rel (%p215) target = $region28
      $region27: #{unet_conv_forward.1} parent=11 // pred_region
        _
      $region28: #{unet_conv_forward.1} parent=11 // pred_fallthru
        _
      // Predicated region
      $region29: #{unet_conv_forward.1} parent=11 // pred_check
        %p218 = pneg %p144
      $region30: #{unet_conv_forward.1} parent=11 // pred_check_branch
        %220 = sbr.rel (%p218) target = $region32
      $region31: #{unet_conv_forward.1} parent=11 // pred_region
        _
      $region32: #{unet_conv_forward.1} parent=11 // pred_fallthru
        _
      // Predicated region
      $region33: #{unet_conv_forward.1} parent=11 // pred_check
        %p221 = pneg %p165
      $region34: #{unet_conv_forward.1} parent=11 // pred_check_branch
        %223 = sbr.rel (%p221) target = $region36
      $region35: #{unet_conv_forward.1} parent=11 // pred_region
        _
      $region36: #{unet_conv_forward.1} parent=11 // pred_fallthru
        _
    $region12: #{unet_conv_forward.1} parent=5 // pred_fallthru
      _
    %p224 = scmp.lt.s32.totalorder %s13, 2
    // Predicated region
    $region37: #{unet_conv_forward.1} parent=5 // pred_check
      %p225 = pneg %p224
    $region38: #{unet_conv_forward.1} parent=5 // pred_check_branch
      %227 = sbr.rel (%p225) target = $region40
    $region39: #{unet_conv_forward.1} parent=5 // pred_region
      // Predicated region
      $region41: #{unet_conv_forward.1} parent=39 // pred_check
        %p228 = pneg %p33
      $region42: #{unet_conv_forward.1} parent=39 // pred_check_branch
        %230 = sbr.rel (%p228) target = $region44
      $region43: #{unet_conv_forward.1} parent=39 // pred_region
        %p231 = scmp.lt.s32.totalorder %s13, 1
        %s232 = scalar_select %p231, %s13, 1
        %s233 = smul.addr %s232, 3
        %s234 = smul.addr %s233, 8
        %s235 = scalar_lea.vmem %s0, %s234
      $region44: #{unet_conv_forward.1} parent=39 // pred_fallthru
        _
    $region40: #{unet_conv_forward.1} parent=5 // pred_fallthru
      _
    %p236 = scmp.le.s32.totalorder 1, %s13
    %p237 = scmp.lt.s32.totalorder %s13, 3
    %p238 = pnand %p236, %p237
    %p239 = pneg %p238
    // Predicated region
    $region45: #{unet_conv_forward.1} parent=5 // pred_check
      _
    $region46: #{unet_conv_forward.1} parent=5 // pred_check_branch
      %241 = sbr.rel (%p238) target = $region48
    $region47: #{unet_conv_forward.1} parent=5 // pred_region
      %s242 = ssub.s32 %s13, 1
      %p243 = scmp.lt.s32.totalorder %s18, 1
      %s244 = scalar_select %p243, %s18, 1
      %s245 = smul.addr %s244, 3
      %s246 = smul.addr %s245, 8
      %s247 = scalar_lea.vmem %s0, %s246
      %p248 = pneg %p39
      %p249 = pneg %p36
      %p250 = pneg %p60
      %p251 = pneg %p57
      %p252 = pneg %p81
      %p253 = pneg %p78
      %p254 = pneg %p102
      %p255 = pneg %p99
      %p256 = pneg %p123
      %p257 = pneg %p120
      %p258 = pneg %p144
      %p259 = pneg %p141
      %p260 = pneg %p165
      %p261 = pneg %p162
      %p262 = pneg %p191
      %p263 = pneg %p188
      %p264 = scmp.lt.s32.totalorder %s18, 1
      %s265 = scalar_select %p264, %s18, 1
      %s266 = smul.addr %s265, 2
      %s267 = smul.addr %s266, 8
      %s268 = scalar_lea.vmem %s7, %s267
      %p269 = scmp.lt.s32.totalorder %s18, 1
      %s270 = scalar_select %p269, %s18, 1
      %s271 = smul.addr %s270, 3
      %s272 = smul.addr %s271, 8
      %s273 = scalar_lea.vmem %s0, %s272
      %p274 = scmp.lt.s32.totalorder %s18, 1
      %s275 = scalar_select %p274, %s18, 1
      %s276 = smul.addr %s275, 2
      %s277 = smul.addr %s276, 8
      %s278 = scalar_lea.vmem %s7, %s277
      %v279 = vld [vmem:[%s273] sm:$0xff]
      %v280 = vld [vmem:[%s273 + $0x8] sm:$0xff]
      %v281 = vld [vmem:[%s1] sm:$0xff]
      %v282 = vld [vmem:[%s1 + $0x8] sm:$0xff]
      %v283 = vld [vmem:[%s1 + $0x10] sm:$0xff]
      %v284 = vld [vmem:[%s1 + $0x18] sm:$0xff]
      %v285 = vld [vmem:[%s1 + $0x20] sm:$0xff]
      %v286 = vld [vmem:[%s1 + $0x28] sm:$0xff]
      %v287 = vld [vmem:[%s1 + $0x30] sm:$0xff]
      %v288 = vld [vmem:[%s1 + $0x38] sm:$0xff]
      %v289 = vld [vmem:[%s273 + $0x1] sm:$0xff]
      %v290 = vld [vmem:[%s273 + $0x9] sm:$0xff]
      %s291 = scalar_lea.vmem %s1, 64
      %v292 = vld [vmem:[%s291] sm:$0xff]
      %v293 = vld [vmem:[%s291 + $0x8] sm:$0xff]
      %v294 = vld [vmem:[%s291 + $0x10] sm:$0xff]
      %v295 = vld [vmem:[%s291 + $0x18] sm:$0xff]
      %v296 = vld [vmem:[%s291 + $0x20] sm:$0xff]
      %v297 = vld [vmem:[%s291 + $0x28] sm:$0xff]
      %v298 = vld [vmem:[%s291 + $0x30] sm:$0xff]
      %v299 = vld [vmem:[%s291 + $0x38] sm:$0xff]
      %vm300 = vcmask 523264
      %v302 = vsel %vm300, %v289, 0
      %v305 = vsel %vm300, %v290, 0
      %307 = vmatprep.subr.mxu0 0.0
      %308 = vmatpush1.msra.mxu0 %v292
      %309 = vmatprep.subr.mxu0 0.0
      %310 = vmatpush1.msra.mxu0 %v293
      %311 = vmatprep.subr.mxu0 0.0
      %312 = vmatpush1.msra.mxu0 %v294
      %313 = vmatprep.subr.mxu0 0.0
      %314 = vmatpush1.msra.mxu0 %v295
      %315 = vmatprep.subr.mxu0 0.0
      %316 = vmatpush1.msra.mxu0 %v296
      %317 = vmatprep.subr.mxu0 0.0
      %318 = vmatpush1.msra.mxu0 %v297
      %319 = vmatprep.subr.mxu0 0.0
      %320 = vmatpush1.msra.mxu0 %v298
      %321 = vmatprep.subr.mxu0 0.0
      %322 = vmatpush1.msra.mxu0 %v299
      %323 = vmatprep.subr.mxu0 0.0
      %324 = vmatpush1.msra.mxu0 0.0
      %325 = vmatprep.subr.mxu0 0.0
      %326 = vmatpush1.msra.mxu0 0.0
      %327 = vmatprep.subr.mxu0 0.0
      %328 = vmatpush1.msra.mxu0 0.0
      %329 = vmatprep.subr.mxu0 0.0
      %330 = vmatpush1.msra.mxu0 0.0
      %331 = vmatprep.subr.mxu0 0.0
      %332 = vmatpush1.msra.mxu0 0.0
      %333 = vmatprep.subr.mxu0 0.0
      %334 = vmatpush1.msra.mxu0 0.0
      %335 = vmatprep.subr.mxu0 0.0
      %336 = vmatpush1.msra.mxu0 0.0
      %337 = vmatprep.subr.mxu0 0.0
      %338 = vmatpush1.msra.mxu0 0.0
      %339 = vmatprep.subr.mxu0 0.0
      %340 = vmatpush1.msra.mxu0 0.0
      %341 = vmatprep.subr.mxu0 0.0
      %342 = vmatpush1.msra.mxu0 0.0
      %343 = vmatprep.subr.mxu0 0.0
      %344 = vmatpush1.msra.mxu0 0.0
      %345 = vmatprep.subr.mxu0 0.0
      %346 = vmatpush1.msra.mxu0 0.0
      %347 = vmatprep.subr.mxu0 0.0
      %348 = vmatpush1.msra.mxu0 0.0
      %349 = vmatprep.subr.mxu0 0.0
      %350 = vmatpush1.msra.mxu0 0.0
      %351 = vmatprep.subr.mxu0 0.0
      %352 = vmatpush1.msra.mxu0 0.0
      %353 = vmatprep.subr.mxu0 0.0
      %354 = vmatpush1.msra.mxu0 0.0
      %355 = vmatprep.subr.mxu0 0.0
      %356 = vmatpush1.msra.mxu0 0.0
      %357 = vmatprep.subr.mxu0 0.0
      %358 = vmatpush1.msra.mxu0 0.0
      %359 = vmatprep.subr.mxu0 0.0
      %360 = vmatpush1.msra.mxu0 0.0
      %361 = vmatprep.subr.mxu0 0.0
      %362 = vmatpush1.msra.mxu0 0.0
      %363 = vmatprep.subr.mxu0 0.0
      %364 = vmatpush1.msra.mxu0 0.0
      %365 = vmatprep.subr.mxu0 0.0
      %366 = vmatpush1.msra.mxu0 0.0
      %367 = vmatprep.subr.mxu0 0.0
      %368 = vmatpush1.msra.mxu0 0.0
      %369 = vmatprep.subr.mxu0 0.0
      %370 = vmatpush1.msra.mxu0 0.0
      %371 = vmatprep.mubr.f32.mxu0 0.0
      %372 = vmatmul.mubr.f32.gmra.mrb[0].mxu0 %v302
      %v373 = vpop.f32.mrb[0].mxu0
      %v374 = vadd.f32 0.0, %v373
      %v375 = vpop.f32.mrb[0].mxu0
      %376 = vmatprep.mubr.f32.mxu0 0.0
      %377 = vmatmul.mubr.f32.gmra.mrb[0].mxu0 %v305
      %v378 = vpop.f32.mrb[0].mxu0
      %v379 = vadd.f32 0.0, %v378
      %v380 = vpop.f32.mrb[0].mxu0
      %381 = vdwg.mxu0
      %v383 = vsel %vm300, %v279, 0
      %v386 = vsel %vm300, %v280, 0
      %388 = vmatprep.subr.mxu0 0.0
      %389 = vmatpush1.msra.mxu0 %v281
      %390 = vmatprep.subr.mxu0 0.0
      %391 = vmatpush1.msra.mxu0 %v282
      %392 = vmatprep.subr.mxu0 0.0
      %393 = vmatpush1.msra.mxu0 %v283
      %394 = vmatprep.subr.mxu0 0.0
      %395 = vmatpush1.msra.mxu0 %v284
      %396 = vmatprep.subr.mxu0 0.0
      %397 = vmatpush1.msra.mxu0 %v285
      %398 = vmatprep.subr.mxu0 0.0
      %399 = vmatpush1.msra.mxu0 %v286
      %400 = vmatprep.subr.mxu0 0.0
      %401 = vmatpush1.msra.mxu0 %v287
      %402 = vmatprep.subr.mxu0 0.0
      %403 = vmatpush1.msra.mxu0 %v288
      %404 = vmatprep.subr.mxu0 0.0
      %405 = vmatpush1.msra.mxu0 0.0
      %406 = vmatprep.subr.mxu0 0.0
      %407 = vmatpush1.msra.mxu0 0.0
      %408 = vmatprep.subr.mxu0 0.0
      %409 = vmatpush1.msra.mxu0 0.0
      %410 = vmatprep.subr.mxu0 0.0
      %411 = vmatpush1.msra.mxu0 0.0
      %412 = vmatprep.subr.mxu0 0.0
      %413 = vmatpush1.msra.mxu0 0.0
      %414 = vmatprep.subr.mxu0 0.0
      %415 = vmatpush1.msra.mxu0 0.0
      %416 = vmatprep.subr.mxu0 0.0
      %417 = vmatpush1.msra.mxu0 0.0
      %418 = vmatprep.subr.mxu0 0.0
      %419 = vmatpush1.msra.mxu0 0.0
      %420 = vmatprep.subr.mxu0 0.0
      %421 = vmatpush1.msra.mxu0 0.0
      %422 = vmatprep.subr.mxu0 0.0
      %423 = vmatpush1.msra.mxu0 0.0
      %424 = vmatprep.subr.mxu0 0.0
      %425 = vmatpush1.msra.mxu0 0.0
      %426 = vmatprep.subr.mxu0 0.0
      %427 = vmatpush1.msra.mxu0 0.0
      %428 = vmatprep.subr.mxu0 0.0
      %429 = vmatpush1.msra.mxu0 0.0
      %430 = vmatprep.subr.mxu0 0.0
      %431 = vmatpush1.msra.mxu0 0.0
      %432 = vmatprep.subr.mxu0 0.0
      %433 = vmatpush1.msra.mxu0 0.0
      %434 = vmatprep.subr.mxu0 0.0
      %435 = vmatpush1.msra.mxu0 0.0
      %436 = vmatprep.subr.mxu0 0.0
      %437 = vmatpush1.msra.mxu0 0.0
      %438 = vmatprep.subr.mxu0 0.0
      %439 = vmatpush1.msra.mxu0 0.0
      %440 = vmatprep.subr.mxu0 0.0
      %441 = vmatpush1.msra.mxu0 0.0
      %442 = vmatprep.subr.mxu0 0.0
      %443 = vmatpush1.msra.mxu0 0.0
      %444 = vmatprep.subr.mxu0 0.0
      %445 = vmatpush1.msra.mxu0 0.0
      %446 = vmatprep.subr.mxu0 0.0
      %447 = vmatpush1.msra.mxu0 0.0
      %448 = vmatprep.subr.mxu0 0.0
      %449 = vmatpush1.msra.mxu0 0.0
      %450 = vmatprep.subr.mxu0 0.0
      %451 = vmatpush1.msra.mxu0 0.0
      %452 = vmatprep.mubr.f32.mxu0 0.0
      %453 = vmatmul.mubr.f32.gmra.mrb[0].mxu0 %v383
      %v454 = vpop.f32.mrb[0].mxu0
      %v455 = vadd.f32 %v374, %v454
      %v456 = vpop.f32.mrb[0].mxu0
      %457 = vmatprep.mubr.f32.mxu0 0.0
      %458 = vmatmul.mubr.f32.gmra.mrb[0].mxu0 %v386
      %v459 = vpop.f32.mrb[0].mxu0
      %v460 = vadd.f32 %v379, %v459
      %v461 = vpop.f32.mrb[0].mxu0
      %462 = vdwg.mxu0
      %v463 = vld [vmem:[%s273 + $0x2] sm:$0xff]
      %v464 = vld [vmem:[%s273 + $0xa] sm:$0xff]
      %s465 = scalar_lea.vmem %s1, 128
      %v466 = vld [vmem:[%s465] sm:$0xff]
      %v467 = vld [vmem:[%s465 + $0x8] sm:$0xff]
      %v468 = vld [vmem:[%s465 + $0x10] sm:$0xff]
      %v469 = vld [vmem:[%s465 + $0x18] sm:$0xff]
      %v470 = vld [vmem:[%s465 + $0x20] sm:$0xff]
      %v471 = vld [vmem:[%s465 + $0x28] sm:$0xff]
      %v472 = vld [vmem:[%s465 + $0x30] sm:$0xff]
      %v473 = vld [vmem:[%s465 + $0x38] sm:$0xff]
      %v475 = vsel %vm300, %v463, 0
      %v478 = vsel %vm300, %v464, 0
      %480 = vmatprep.subr.mxu0 0.0
      %481 = vmatpush1.msra.mxu0 %v466
      %482 = vmatprep.subr.mxu0 0.0
      %483 = vmatpush1.msra.mxu0 %v467
      %484 = vmatprep.subr.mxu0 0.0
      %485 = vmatpush1.msra.mxu0 %v468
      %486 = vmatprep.subr.mxu0 0.0
      %487 = vmatpush1.msra.mxu0 %v469
      %488 = vmatprep.subr.mxu0 0.0
      %489 = vmatpush1.msra.mxu0 %v470
      %490 = vmatprep.subr.mxu0 0.0
      %491 = vmatpush1.msra.mxu0 %v471
      %492 = vmatprep.subr.mxu0 0.0
      %493 = vmatpush1.msra.mxu0 %v472
      %494 = vmatprep.subr.mxu0 0.0
      %495 = vmatpush1.msra.mxu0 %v473
      %496 = vmatprep.subr.mxu0 0.0
      %497 = vmatpush1.msra.mxu0 0.0
      %498 = vmatprep.subr.mxu0 0.0
      %499 = vmatpush1.msra.mxu0 0.0
      %500 = vmatprep.subr.mxu0 0.0
      %501 = vmatpush1.msra.mxu0 0.0
      %502 = vmatprep.subr.mxu0 0.0
      %503 = vmatpush1.msra.mxu0 0.0
      %504 = vmatprep.subr.mxu0 0.0
      %505 = vmatpush1.msra.mxu0 0.0
      %506 = vmatprep.subr.mxu0 0.0
      %507 = vmatpush1.msra.mxu0 0.0
      %508 = vmatprep.subr.mxu0 0.0
      %509 = vmatpush1.msra.mxu0 0.0
      %510 = vmatprep.subr.mxu0 0.0
      %511 = vmatpush1.msra.mxu0 0.0
      %512 = vmatprep.subr.mxu0 0.0
      %513 = vmatpush1.msra.mxu0 0.0
      %514 = vmatprep.subr.mxu0 0.0
      %515 = vmatpush1.msra.mxu0 0.0
      %516 = vmatprep.subr.mxu0 0.0
      %517 = vmatpush1.msra.mxu0 0.0
      %518 = vmatprep.subr.mxu0 0.0
      %519 = vmatpush1.msra.mxu0 0.0
      %520 = vmatprep.subr.mxu0 0.0
      %521 = vmatpush1.msra.mxu0 0.0
      %522 = vmatprep.subr.mxu0 0.0
      %523 = vmatpush1.msra.mxu0 0.0
      %524 = vmatprep.subr.mxu0 0.0
      %525 = vmatpush1.msra.mxu0 0.0
      %526 = vmatprep.subr.mxu0 0.0
      %527 = vmatpush1.msra.mxu0 0.0
      %528 = vmatprep.subr.mxu0 0.0
      %529 = vmatpush1.msra.mxu0 0.0
      %530 = vmatprep.subr.mxu0 0.0
      %531 = vmatpush1.msra.mxu0 0.0
      %532 = vmatprep.subr.mxu0 0.0
      %533 = vmatpush1.msra.mxu0 0.0
      %534 = vmatprep.subr.mxu0 0.0
      %535 = vmatpush1.msra.mxu0 0.0
      %536 = vmatprep.subr.mxu0 0.0
      %537 = vmatpush1.msra.mxu0 0.0
      %538 = vmatprep.subr.mxu0 0.0
      %539 = vmatpush1.msra.mxu0 0.0
      %540 = vmatprep.subr.mxu0 0.0
      %541 = vmatpush1.msra.mxu0 0.0
      %542 = vmatprep.subr.mxu0 0.0
      %543 = vmatpush1.msra.mxu0 0.0
      %544 = vmatprep.mubr.f32.mxu0 0.0
      %545 = vmatmul.mubr.f32.gmra.mrb[0].mxu0 %v475
      %v546 = vpop.f32.mrb[0].mxu0
      %v547 = vadd.f32 0.0, %v546
      %v548 = vpop.f32.mrb[0].mxu0
      %549 = vmatprep.mubr.f32.mxu0 0.0
      %550 = vmatmul.mubr.f32.gmra.mrb[0].mxu0 %v478
      %v551 = vpop.f32.mrb[0].mxu0
      %v552 = vadd.f32 0.0, %v551
      %v553 = vpop.f32.mrb[0].mxu0
      %554 = vdwg.mxu0
      %v555 = vadd.f32 %v455, %v547
      %v556 = vadd.f32 %v460, %v552
      %v557 = vld [vmem:[%s2] sm:$0x1]
      %v559 = vlaneseq
      %v560 = vshrl.u32 %v559, 7
      %v561 = vsub.s32 0, %v560
      %v562 = vrot.slane %v557, %v561
      %v564 = vmul.f32 %v555, %v562
      %v565 = vmul.f32 %v556, %v562
      %v566 = vld [vmem:[%s3] sm:$0x1]
      %v568 = vlaneseq
      %v569 = vshrl.u32 %v568, 7
      %v570 = vsub.s32 0, %v569
      %v571 = vrot.slane %v566, %v570
      %v573 = vadd.f32 %v564, %v571
      %v574 = vadd.f32 %v565, %v571
      %v575 = vmax.f32 %v573, 0.0
      %v576 = vmax.f32 %v574, 0.0
      %577 = vst [vmem:[#allocation2] sm:$0x1] 0.0
      %578 = vst [vmem:[#allocation2 + $0x11] sm:$0x1] 0.0
      %579 = vst [vmem:[#allocation2 + $0x1] sm:$0xff] %v575
      %580 = vst [vmem:[#allocation2 + $0x9] sm:$0xff] %v576
      %v581 = vld [vmem:[#allocation2] sm:$0xff]
      %v582 = vld [vmem:[#allocation2 + $0x8] sm:$0xff]
      %v583 = vld [vmem:[%s4] sm:$0xff]
      %v584 = vld [vmem:[%s4 + $0x8] sm:$0xff]
      %v585 = vld [vmem:[%s4 + $0x10] sm:$0xff]
      %v586 = vld [vmem:[%s4 + $0x18] sm:$0xff]
      %v587 = vld [vmem:[%s4 + $0x20] sm:$0xff]
      %v588 = vld [vmem:[%s4 + $0x28] sm:$0xff]
      %v589 = vld [vmem:[%s4 + $0x30] sm:$0xff]
      %v590 = vld [vmem:[%s4 + $0x38] sm:$0xff]
      %v591 = vld [vmem:[%s4 + $0x40] sm:$0xff]
      %v592 = vld [vmem:[%s4 + $0x48] sm:$0xff]
      %v593 = vld [vmem:[%s4 + $0x50] sm:$0xff]
      %v594 = vld [vmem:[%s4 + $0x58] sm:$0xff]
      %v595 = vld [vmem:[%s4 + $0x60] sm:$0xff]
      %v596 = vld [vmem:[%s4 + $0x68] sm:$0xff]
      %v597 = vld [vmem:[%s4 + $0x70] sm:$0xff]
      %v598 = vld [vmem:[%s4 + $0x78] sm:$0xff]
      %v599 = vld [vmem:[#allocation2 + $0x1] sm:$0xff]
      %v600 = vld [vmem:[#allocation2 + $0x9] sm:$0xff]
      %s601 = scalar_lea.vmem %s4, 128
      %v602 = vld [vmem:[%s601] sm:$0xff]
      %v603 = vld [vmem:[%s601 + $0x8] sm:$0xff]
      %v604 = vld [vmem:[%s601 + $0x10] sm:$0xff]
      %v605 = vld [vmem:[%s601 + $0x18] sm:$0xff]
      %v606 = vld [vmem:[%s601 + $0x20] sm:$0xff]
      %v607 = vld [vmem:[%s601 + $0x28] sm:$0xff]
      %v608 = vld [vmem:[%s601 + $0x30] sm:$0xff]
      %v609 = vld [vmem:[%s601 + $0x38] sm:$0xff]
      %v610 = vld [vmem:[%s601 + $0x40] sm:$0xff]
      %v611 = vld [vmem:[%s601 + $0x48] sm:$0xff]
      %v612 = vld [vmem:[%s601 + $0x50] sm:$0xff]
      %v613 = vld [vmem:[%s601 + $0x58] sm:$0xff]
      %v614 = vld [vmem:[%s601 + $0x60] sm:$0xff]
      %v615 = vld [vmem:[%s601 + $0x68] sm:$0xff]
      %v616 = vld [vmem:[%s601 + $0x70] sm:$0xff]
      %v617 = vld [vmem:[%s601 + $0x78] sm:$0xff]
      %618 = vmatprep.subr.mxu0 0.0
      %619 = vmatpush1.msra.mxu0 %v602
      %620 = vmatprep.subr.mxu0 0.0
      %621 = vmatpush1.msra.mxu0 %v603
      %622 = vmatprep.subr.mxu0 0.0
      %623 = vmatpush1.msra.mxu0 %v604
      %624 = vmatprep.subr.mxu0 0.0
      %625 = vmatpush1.msra.mxu0 %v605
      %626 = vmatprep.subr.mxu0 0.0
      %627 = vmatpush1.msra.mxu0 %v606
      %628 = vmatprep.subr.mxu0 0.0
      %629 = vmatpush1.msra.mxu0 %v607
      %630 = vmatprep.subr.mxu0 0.0
      %631 = vmatpush1.msra.mxu0 %v608
      %632 = vmatprep.subr.mxu0 0.0
      %633 = vmatpush1.msra.mxu0 %v609
      %634 = vmatprep.subr.mxu0 0.0
      %635 = vmatpush1.msra.mxu0 %v610
      %636 = vmatprep.subr.mxu0 0.0
      %637 = vmatpush1.msra.mxu0 %v611
      %638 = vmatprep.subr.mxu0 0.0
      %639 = vmatpush1.msra.mxu0 %v612
      %640 = vmatprep.subr.mxu0 0.0
      %641 = vmatpush1.msra.mxu0 %v613
      %642 = vmatprep.subr.mxu0 0.0
      %643 = vmatpush1.msra.mxu0 %v614
      %644 = vmatprep.subr.mxu0 0.0
      %645 = vmatpush1.msra.mxu0 %v615
      %646 = vmatprep.subr.mxu0 0.0
      %647 = vmatpush1.msra.mxu0 %v616
      %648 = vmatprep.subr.mxu0 0.0
      %649 = vmatpush1.msra.mxu0 %v617
      %650 = vmatprep.subr.mxu0 0.0
      %651 = vmatpush1.msra.mxu0 0.0
      %652 = vmatprep.subr.mxu0 0.0
      %653 = vmatpush1.msra.mxu0 0.0
      %654 = vmatprep.subr.mxu0 0.0
      %655 = vmatpush1.msra.mxu0 0.0
      %656 = vmatprep.subr.mxu0 0.0
      %657 = vmatpush1.msra.mxu0 0.0
      %658 = vmatprep.subr.mxu0 0.0
      %659 = vmatpush1.msra.mxu0 0.0
      %660 = vmatprep.subr.mxu0 0.0
      %661 = vmatpush1.msra.mxu0 0.0
      %662 = vmatprep.subr.mxu0 0.0
      %663 = vmatpush1.msra.mxu0 0.0
      %664 = vmatprep.subr.mxu0 0.0
      %665 = vmatpush1.msra.mxu0 0.0
      %666 = vmatprep.subr.mxu0 0.0
      %667 = vmatpush1.msra.mxu0 0.0
      %668 = vmatprep.subr.mxu0 0.0
      %669 = vmatpush1.msra.mxu0 0.0
      %670 = vmatprep.subr.mxu0 0.0
      %671 = vmatpush1.msra.mxu0 0.0
      %672 = vmatprep.subr.mxu0 0.0
      %673 = vmatpush1.msra.mxu0 0.0
      %674 = vmatprep.subr.mxu0 0.0
      %675 = vmatpush1.msra.mxu0 0.0
      %676 = vmatprep.subr.mxu0 0.0
      %677 = vmatpush1.msra.mxu0 0.0
      %678 = vmatprep.subr.mxu0 0.0
      %679 = vmatpush1.msra.mxu0 0.0
      %680 = vmatprep.subr.mxu0 0.0
      %681 = vmatpush1.msra.mxu0 0.0
      %682 = vmatprep.mubr.f32.mxu0 0.0
      %683 = vmatmul.mubr.f32.gmra.mrb[0].mxu0 %v599
      %v684 = vpop.f32.mrb[0].mxu0
      %v685 = vadd.f32 0.0, %v684
      %v686 = vpop.f32.mrb[0].mxu0
      %687 = vmatprep.mubr.f32.mxu0 0.0
      %688 = vmatmul.mubr.f32.gmra.mrb[0].mxu0 %v600
      %v689 = vpop.f32.mrb[0].mxu0
      %v690 = vadd.f32 0.0, %v689
      %v691 = vpop.f32.mrb[0].mxu0
      %692 = vdwg.mxu0
      %693 = vmatprep.subr.mxu0 0.0
      %694 = vmatpush1.msra.mxu0 %v583
      %695 = vmatprep.subr.mxu0 0.0
      %696 = vmatpush1.msra.mxu0 %v584
      %697 = vmatprep.subr.mxu0 0.0
      %698 = vmatpush1.msra.mxu0 %v585
      %699 = vmatprep.subr.mxu0 0.0
      %700 = vmatpush1.msra.mxu0 %v586
      %701 = vmatprep.subr.mxu0 0.0
      %702 = vmatpush1.msra.mxu0 %v587
      %703 = vmatprep.subr.mxu0 0.0
      %704 = vmatpush1.msra.mxu0 %v588
      %705 = vmatprep.subr.mxu0 0.0
      %706 = vmatpush1.msra.mxu0 %v589
      %707 = vmatprep.subr.mxu0 0.0
      %708 = vmatpush1.msra.mxu0 %v590
      %709 = vmatprep.subr.mxu0 0.0
      %710 = vmatpush1.msra.mxu0 %v591
      %711 = vmatprep.subr.mxu0 0.0
      %712 = vmatpush1.msra.mxu0 %v592
      %713 = vmatprep.subr.mxu0 0.0
      %714 = vmatpush1.msra.mxu0 %v593
      %715 = vmatprep.subr.mxu0 0.0
      %716 = vmatpush1.msra.mxu0 %v594
      %717 = vmatprep.subr.mxu0 0.0
      %718 = vmatpush1.msra.mxu0 %v595
      %719 = vmatprep.subr.mxu0 0.0
      %720 = vmatpush1.msra.mxu0 %v596
      %721 = vmatprep.subr.mxu0 0.0
      %722 = vmatpush1.msra.mxu0 %v597
      %723 = vmatprep.subr.mxu0 0.0
      %724 = vmatpush1.msra.mxu0 %v598
      %725 = vmatprep.subr.mxu0 0.0
      %726 = vmatpush1.msra.mxu0 0.0
      %727 = vmatprep.subr.mxu0 0.0
      %728 = vmatpush1.msra.mxu0 0.0
      %729 = vmatprep.subr.mxu0 0.0
      %730 = vmatpush1.msra.mxu0 0.0
      %731 = vmatprep.subr.mxu0 0.0
      %732 = vmatpush1.msra.mxu0 0.0
      %733 = vmatprep.subr.mxu0 0.0
      %734 = vmatpush1.msra.mxu0 0.0
      %735 = vmatprep.subr.mxu0 0.0
      %736 = vmatpush1.msra.mxu0 0.0
      %737 = vmatprep.subr.mxu0 0.0
      %738 = vmatpush1.msra.mxu0 0.0
      %739 = vmatprep.subr.mxu0 0.0
      %740 = vmatpush1.msra.mxu0 0.0
      %741 = vmatprep.subr.mxu0 0.0
      %742 = vmatpush1.msra.mxu0 0.0
      %743 = vmatprep.subr.mxu0 0.0
      %744 = vmatpush1.msra.mxu0 0.0
      %745 = vmatprep.subr.mxu0 0.0
      %746 = vmatpush1.msra.mxu0 0.0
      %747 = vmatprep.subr.mxu0 0.0
      %748 = vmatpush1.msra.mxu0 0.0
      %749 = vmatprep.subr.mxu0 0.0
      %750 = vmatpush1.msra.mxu0 0.0
      %751 = vmatprep.subr.mxu0 0.0
      %752 = vmatpush1.msra.mxu0 0.0
      %753 = vmatprep.subr.mxu0 0.0
      %754 = vmatpush1.msra.mxu0 0.0
      %755 = vmatprep.subr.mxu0 0.0
      %756 = vmatpush1.msra.mxu0 0.0
      %757 = vmatprep.mubr.f32.mxu0 0.0
      %758 = vmatmul.mubr.f32.gmra.mrb[0].mxu0 %v581
      %v759 = vpop.f32.mrb[0].mxu0
      %v760 = vadd.f32 %v685, %v759
      %v761 = vpop.f32.mrb[0].mxu0
      %762 = vmatprep.mubr.f32.mxu0 0.0
      %763 = vmatmul.mubr.f32.gmra.mrb[0].mxu0 %v582
      %v764 = vpop.f32.mrb[0].mxu0
      %v765 = vadd.f32 %v690, %v764
      %v766 = vpop.f32.mrb[0].mxu0
      %767 = vdwg.mxu0
      %v768 = vld [vmem:[#allocation2 + $0x2] sm:$0xff]
      %v769 = vld [vmem:[#allocation2 + $0xa] sm:$0xff]
      %s770 = scalar_lea.vmem %s4, 256
      %v771 = vld [vmem:[%s770] sm:$0xff]
      %v772 = vld [vmem:[%s770 + $0x8] sm:$0xff]
      %v773 = vld [vmem:[%s770 + $0x10] sm:$0xff]
      %v774 = vld [vmem:[%s770 + $0x18] sm:$0xff]
      %v775 = vld [vmem:[%s770 + $0x20] sm:$0xff]
      %v776 = vld [vmem:[%s770 + $0x28] sm:$0xff]
      %v777 = vld [vmem:[%s770 + $0x30] sm:$0xff]
      %v778 = vld [vmem:[%s770 + $0x38] sm:$0xff]
      %v779 = vld [vmem:[%s770 + $0x40] sm:$0xff]
      %v780 = vld [vmem:[%s770 + $0x48] sm:$0xff]
      %v781 = vld [vmem:[%s770 + $0x50] sm:$0xff]
      %v782 = vld [vmem:[%s770 + $0x58] sm:$0xff]
      %v783 = vld [vmem:[%s770 + $0x60] sm:$0xff]
      %v784 = vld [vmem:[%s770 + $0x68] sm:$0xff]
      %v785 = vld [vmem:[%s770 + $0x70] sm:$0xff]
      %v786 = vld [vmem:[%s770 + $0x78] sm:$0xff]
      %787 = vmatprep.subr.mxu0 0.0
      %788 = vmatpush1.msra.mxu0 %v771
      %789 = vmatprep.subr.mxu0 0.0
      %790 = vmatpush1.msra.mxu0 %v772
      %791 = vmatprep.subr.mxu0 0.0
      %792 = vmatpush1.msra.mxu0 %v773
      %793 = vmatprep.subr.mxu0 0.0
      %794 = vmatpush1.msra.mxu0 %v774
      %795 = vmatprep.subr.mxu0 0.0
      %796 = vmatpush1.msra.mxu0 %v775
      %797 = vmatprep.subr.mxu0 0.0
      %798 = vmatpush1.msra.mxu0 %v776
      %799 = vmatprep.subr.mxu0 0.0
      %800 = vmatpush1.msra.mxu0 %v777
      %801 = vmatprep.subr.mxu0 0.0
      %802 = vmatpush1.msra.mxu0 %v778
      %803 = vmatprep.subr.mxu0 0.0
      %804 = vmatpush1.msra.mxu0 %v779
      %805 = vmatprep.subr.mxu0 0.0
      %806 = vmatpush1.msra.mxu0 %v780
      %807 = vmatprep.subr.mxu0 0.0
      %808 = vmatpush1.msra.mxu0 %v781
      %809 = vmatprep.subr.mxu0 0.0
      %810 = vmatpush1.msra.mxu0 %v782
      %811 = vmatprep.subr.mxu0 0.0
      %812 = vmatpush1.msra.mxu0 %v783
      %813 = vmatprep.subr.mxu0 0.0
      %814 = vmatpush1.msra.mxu0 %v784
      %815 = vmatprep.subr.mxu0 0.0
      %816 = vmatpush1.msra.mxu0 %v785
      %817 = vmatprep.subr.mxu0 0.0
      %818 = vmatpush1.msra.mxu0 %v786
      %819 = vmatprep.subr.mxu0 0.0
      %820 = vmatpush1.msra.mxu0 0.0
      %821 = vmatprep.subr.mxu0 0.0
      %822 = vmatpush1.msra.mxu0 0.0
      %823 = vmatprep.subr.mxu0 0.0
      %824 = vmatpush1.msra.mxu0 0.0
      %825 = vmatprep.subr.mxu0 0.0
      %826 = vmatpush1.msra.mxu0 0.0
      %827 = vmatprep.subr.mxu0 0.0
      %828 = vmatpush1.msra.mxu0 0.0
      %829 = vmatprep.subr.mxu0 0.0
      %830 = vmatpush1.msra.mxu0 0.0
      %831 = vmatprep.subr.mxu0 0.0
      %832 = vmatpush1.msra.mxu0 0.0
      %833 = vmatprep.subr.mxu0 0.0
      %834 = vmatpush1.msra.mxu0 0.0
      %835 = vmatprep.subr.mxu0 0.0
      %836 = vmatpush1.msra.mxu0 0.0
      %837 = vmatprep.subr.mxu0 0.0
      %838 = vmatpush1.msra.mxu0 0.0
      %839 = vmatprep.subr.mxu0 0.0
      %840 = vmatpush1.msra.mxu0 0.0
      %841 = vmatprep.subr.mxu0 0.0
      %842 = vmatpush1.msra.mxu0 0.0
      %843 = vmatprep.subr.mxu0 0.0
      %844 = vmatpush1.msra.mxu0 0.0
      %845 = vmatprep.subr.mxu0 0.0
      %846 = vmatpush1.msra.mxu0 0.0
      %847 = vmatprep.subr.mxu0 0.0
      %848 = vmatpush1.msra.mxu0 0.0
      %849 = vmatprep.subr.mxu0 0.0
      %850 = vmatpush1.msra.mxu0 0.0
      %851 = vmatprep.mubr.f32.mxu0 0.0
      %852 = vmatmul.mubr.f32.gmra.mrb[0].mxu0 %v768
      %v853 = vpop.f32.mrb[0].mxu0
      %v854 = vadd.f32 0.0, %v853
      %v855 = vpop.f32.mrb[0].mxu0
      %856 = vmatprep.mubr.f32.mxu0 0.0
      %857 = vmatmul.mubr.f32.gmra.mrb[0].mxu0 %v769
      %v858 = vpop.f32.mrb[0].mxu0
      %v859 = vadd.f32 0.0, %v858
      %v860 = vpop.f32.mrb[0].mxu0
      %861 = vdwg.mxu0
      %v862 = vadd.f32 %v760, %v854
      %v863 = vadd.f32 %v765, %v859
      %v864 = vld [vmem:[%s5] sm:$0x1]
      %v866 = vlaneseq
      %v867 = vshrl.u32 %v866, 7
      %v868 = vsub.s32 0, %v867
      %v869 = vrot.slane %v864, %v868
      %v871 = vmul.f32 %v862, %v869
      %v872 = vmul.f32 %v863, %v869
      %v873 = vld [vmem:[%s6] sm:$0x1]
      %v875 = vlaneseq
      %v876 = vshrl.u32 %v875, 7
      %v877 = vsub.s32 0, %v876
      %v878 = vrot.slane %v873, %v877
      %v880 = vadd.f32 %v871, %v878
      %v881 = vadd.f32 %v872, %v878
      %v882 = vmax.f32 %v880, 0.0
      %v883 = vmax.f32 %v881, 0.0
      %884 = vst [vmem:[%s278] sm:$0xff] %v882
      %885 = vst [vmem:[%s278 + $0x8] sm:$0xff] %v883
      %p886 = scmp.lt.s32.totalorder %s18, 1
      %s887 = scalar_select %p886, %s18, 1
      %s888 = smul.addr %s887, 2
      %s889 = smul.addr %s888, 8
      %s890 = scalar_lea.vmem %s7, %s889
      // Predicated region
      $region49: #{unet_conv_forward.1} parent=47 // pred_check
        %p891 = pneg %p188
      $region50: #{unet_conv_forward.1} parent=47 // pred_check_branch
        %893 = sbr.rel (%p891) target = $region52
      $region51: #{unet_conv_forward.1} parent=47 // pred_region
        _
      $region52: #{unet_conv_forward.1} parent=47 // pred_fallthru
        _
    $region48: #{unet_conv_forward.1} parent=5 // pred_fallthru
      _
    %p894 = scmp.le.s32.totalorder 2, %s13
    // Predicated region
    $region53: #{unet_conv_forward.1} parent=5 // pred_check
      %p895 = pneg %p894
    $region54: #{unet_conv_forward.1} parent=5 // pred_check_branch
      %897 = sbr.rel (%p895) target = $region56
    $region55: #{unet_conv_forward.1} parent=5 // pred_region
      %s898 = ssub.s32 %s13, 2
      // Predicated region
      $region57: #{unet_conv_forward.1} parent=55 // pred_check
        %p899 = pneg %p194
      $region58: #{unet_conv_forward.1} parent=55 // pred_check_branch
        %901 = sbr.rel (%p899) target = $region60
      $region59: #{unet_conv_forward.1} parent=55 // pred_region
        %p902 = scmp.lt.s32.totalorder %s19, 1
        %s903 = scalar_select %p902, %s19, 1
        %s904 = smul.addr %s903, 2
        %s905 = smul.addr %s904, 8
        %s906 = scalar_lea.vmem %s7, %s905
      $region60: #{unet_conv_forward.1} parent=55 // pred_fallthru
        _
    $region56: #{unet_conv_forward.1} parent=5 // pred_fallthru
      _
  $region6: #{unet_conv_forward.1} parent=0 // loop_footer
    %s17 = sadd.s32 1, %s13
  $region7: #{unet_conv_forward.1} parent=0 // loop_footer_branch
    %12 = sbr.rel target = $region3
  $region8: #{unet_conv_forward.1} parent=0 // loop_exit
    _

</llo_original>
